<compile_context>
chip_gen: v5e
topology: v5e:2x2
jax: 0.10.0
libtpu: 0.0.40
codegen_flags: <defaults>
</compile_context>

<pallas_src>
import math
import functools

import jax
import jax.numpy as jnp
from jax.experimental import pallas as pl
from jax.experimental.pallas import tpu as pltpu


def _softplus(x):
    # numerically stable softplus, matches F.softplus semantics
    return jnp.maximum(x, 0.0) + jnp.log1p(jnp.exp(-jnp.abs(x)))


def policy_kernel(obs_ref, eps_ref,
                  w1_ref, b1_ref, w2_ref, b2_ref, w3_ref, b3_ref,
                  wh_ref, bh_ref,
                  out_ref, *, act_limit, n_action):
    mm_dtype = w1_ref.dtype  # bf16 MXU operands, f32 accumulation

    # NN backbone: Linear -> ReLU (x3, final activation is also ReLU).
    # obs arrives already cast to bf16 (hoisted to the wrapper).
    h = jnp.dot(obs_ref[...], w1_ref[...],
                preferred_element_type=jnp.float32) + b1_ref[...]
    h = jnp.maximum(h, 0.0)
    h = jnp.dot(h.astype(mm_dtype), w2_ref[...],
                preferred_element_type=jnp.float32) + b2_ref[...]
    h = jnp.maximum(h, 0.0)
    h = jnp.dot(h.astype(mm_dtype), w3_ref[...],
                preferred_element_type=jnp.float32) + b3_ref[...]
    h = jnp.maximum(h, 0.0)

    # Fused mu|std head: one matmul, split with static lane slices.
    head = jnp.dot(h.astype(mm_dtype), wh_ref[...],
                   preferred_element_type=jnp.float32) + bh_ref[...]
    mu = head[:, :n_action]
    std = jnp.clip(head[:, n_action:], 2e-10, 10.0)

    # rsample: probs_action = mu + std * eps   (eps kept in f32 for logp)
    eps = eps_ref[...]
    x = mu + std * eps

    # action = act_limit * tanh(probs_action)  -> lanes [0, n_action)
    out_ref[:, :n_action] = (act_limit * jnp.tanh(x)).astype(out_ref.dtype)

    # logprob = sum( Normal(mu,std).log_prob(x) - (2log2 - 2x - 2softplus(-2x)) )
    # (x - mu)/std == eps exactly by construction, so eps is used directly.
    # Per-element constants (-0.5*log(2pi) - 2*log(2)) folded into one scalar
    # added after the lane reduction.              -> lane n_action
    var_terms = (-0.5 * eps * eps
                 - jnp.log(std)
                 + 2.0 * x
                 + 2.0 * _softplus(-2.0 * x))
    const = n_action * (-0.5 * math.log(2.0 * math.pi) - 2.0 * math.log(2.0))
    out_ref[:, n_action:] = jnp.sum(var_terms, axis=-1, keepdims=True) + const


def prepare_params(params, *, mm_dtype=jnp.bfloat16):
    """One-time weight prep (hoisted out of the per-call path):
    concatenate the mu|std heads and cast matmul operands to bf16."""
    return dict(
        w1=params["w1"].astype(mm_dtype), b1=params["b1"].astype(jnp.float32),
        w2=params["w2"].astype(mm_dtype), b2=params["b2"].astype(jnp.float32),
        w3=params["w3"].astype(mm_dtype), b3=params["b3"].astype(jnp.float32),
        wh=jnp.concatenate([params["wmu"], params["wstd"]], axis=1).astype(mm_dtype),
        bh=jnp.concatenate([params["bmu"], params["bstd"]], axis=1).astype(jnp.float32),
    )


def _choose_tiling(B):
    """Pick (TB, num_tiles): TB a multiple of 16 (bf16 sublane packing),
    capped at 1024, and >= 2 tiles whenever the batch allows it so the
    'parallel' batch axis can be sharded across v7x's two TensorCores."""
    B16 = max(16, ((B + 15) // 16) * 16)
    if B16 <= 16:
        return B16, 1
    TB = min(1024, ((((B16 + 1) // 2) + 15) // 16) * 16)
    num_tiles = (B16 + TB - 1) // TB
    return TB, num_tiles


def policy_forward(obs, eps, prepped, act_limit):
    """Forward pass using params prepared by prepare_params()."""
    B, n_obs = obs.shape
    n_action = prepped["wh"].shape[1] // 2
    mm_dtype = prepped["w1"].dtype

    obs = jnp.asarray(obs, mm_dtype)     # MXU operand cast hoisted to wrapper
    eps = jnp.asarray(eps, jnp.float32)  # stays f32: logp uses eps^2

    TB, num_tiles = _choose_tiling(B)
    B_pad = TB * num_tiles
    if B_pad != B:
        obs = jnp.pad(obs, ((0, B_pad - B), (0, 0)))
        eps = jnp.pad(eps, ((0, B_pad - B), (0, 0)))

    def tile_spec(feat):
        return pl.BlockSpec((TB, feat), lambda i: (i, 0))

    def resident_spec(arr):
        # Same block for every grid step -> fetched once, stays VMEM-resident.
        return pl.BlockSpec(arr.shape, lambda i: (0, 0))

    grid_spec = pltpu.PrefetchScalarGridSpec(
        num_scalar_prefetch=0,
        grid=(num_tiles,),
        in_specs=[
            tile_spec(n_obs), tile_spec(n_action),
            resident_spec(prepped["w1"]), resident_spec(prepped["b1"]),
            resident_spec(prepped["w2"]), resident_spec(prepped["b2"]),
            resident_spec(prepped["w3"]), resident_spec(prepped["b3"]),
            resident_spec(prepped["wh"]), resident_spec(prepped["bh"]),
        ],
        out_specs=tile_spec(n_action + 1),
    )

    # Actual VMEM footprint is small; budget tiered by TB instead of 32 MiB
    # (which would reserve half of v7x's 64 MiB physical VMEM).
    vmem_limit = (8 if TB <= 128 else (16 if TB <= 512 else 24)) * 1024 * 1024

    out = pl.pallas_call(
        functools.partial(policy_kernel,
                          act_limit=float(act_limit), n_action=n_action),
        out_shape=jax.ShapeDtypeStruct((B_pad, n_action + 1), jnp.float32),
        grid_spec=grid_spec,
        compiler_params=pltpu.CompilerParams(
            dimension_semantics=("parallel",),   # megacore / v7x dual-TC sharding
            vmem_limit_bytes=vmem_limit,
        ),
    )(obs, eps,
      prepped["w1"], prepped["b1"], prepped["w2"], prepped["b2"],
      prepped["w3"], prepped["b3"], prepped["wh"], prepped["bh"])

    action = out[:B, :n_action]
    logprob = out[:B, n_action]          # shape [B], matching .sum(dim=-1)
    return action, logprob


def policy_forward_ref(obs, eps, params, act_limit, *, mm_dtype=jnp.bfloat16):
    """Pure-JAX reference mirroring the kernel's bf16-operand / f32-accum math."""
    def mm(x, w):
        return jnp.dot(x.astype(mm_dtype), w.astype(mm_dtype),
                       preferred_element_type=jnp.float32)
    h = jnp.maximum(mm(obs, params["w1"]) + params["b1"], 0.0)
    h = jnp.maximum(mm(h, params["w2"]) + params["b2"], 0.0)
    h = jnp.maximum(mm(h, params["w3"]) + params["b3"], 0.0)
    mu = mm(h, params["wmu"]) + params["bmu"]
    std = jnp.clip(mm(h, params["wstd"]) + params["bstd"], 2e-10, 10.0)
    x = mu + std * eps
    action = act_limit * jnp.tanh(x)
    logp_normal = -0.5 * jnp.square(eps) - jnp.log(std) - 0.5 * math.log(2.0 * math.pi)
    corr = 2.0 * math.log(2.0) - 2.0 * x - 2.0 * _softplus(-2.0 * x)
    logp = jnp.sum(logp_normal - corr, axis=-1)
    return action, logp


def init_params(key, n_observation, n_action, hidden=256):
    """Deterministic PyTorch-Linear-style init: U(-1/sqrt(in), 1/sqrt(in))."""
    def linear(key, fan_in, fan_out):
        kw, kb = jax.random.split(key)
        bound = 1.0 / math.sqrt(fan_in)
        w = jax.random.uniform(kw, (fan_in, fan_out), jnp.float32, -bound, bound)
        b = jax.random.uniform(kb, (1, fan_out), jnp.float32, -bound, bound)
        return w, b

    ks = jax.random.split(key, 5)
    w1, b1 = linear(ks[0], n_observation, hidden)
    w2, b2 = linear(ks[1], hidden, hidden)
    w3, b3 = linear(ks[2], hidden, hidden)
    wmu, bmu = linear(ks[3], hidden, n_action)
    wstd, bstd = linear(ks[4], hidden, n_action)
    return dict(w1=w1, b1=b1, w2=w2, b2=b2, w3=w3, b3=b3,
                wmu=wmu, bmu=bmu, wstd=wstd, bstd=bstd)


if __name__ == "__main__":
    key = jax.random.PRNGKey(0)
    k_obs, k_eps, k_par, k_obs2, k_eps2 = jax.random.split(key, 5)

    n_observation = 16
    n_action = 8
    act_limit = 2.0

    params = init_params(k_par, n_observation, n_action, hidden=256)
    prepped = prepare_params(params)       # one-time weight cast/concat

    # --- small batch (single tile) ---
    batch = 8
    obs = jax.random.normal(k_obs, (batch, n_observation), jnp.float32)
    eps = jax.random.normal(k_eps, (batch, n_action), jnp.float32)  # rsample noise

    action, logprob = policy_forward(obs, eps, prepped, act_limit)
    jax.block_until_ready((action, logprob))

    assert action.shape == (batch, n_action)
    assert logprob.shape == (batch,)
    assert bool(jnp.all(jnp.isfinite(action))) and bool(jnp.all(jnp.isfinite(logprob)))

    action_ref, logprob_ref = policy_forward_ref(obs, eps, params, act_limit)
    assert jnp.allclose(action, action_ref, atol=2e-2, rtol=2e-2)
    assert jnp.allclose(logprob, logprob_ref, atol=2e-2, rtol=2e-2)

    # --- ragged batch (exercises padding + the >=2-tile core-aware path) ---
    batch2 = 40
    obs2 = jax.random.normal(k_obs2, (batch2, n_observation), jnp.float32)
    eps2 = jax.random.normal(k_eps2, (batch2, n_action), jnp.float32)

    action2, logprob2 = policy_forward(obs2, eps2, prepped, act_limit)
    jax.block_until_ready((action2, logprob2))

    assert action2.shape == (batch2, n_action)
    assert logprob2.shape == (batch2,)
    action2_ref, logprob2_ref = policy_forward_ref(obs2, eps2, params, act_limit)
    assert jnp.allclose(action2, action2_ref, atol=2e-2, rtol=2e-2)
    assert jnp.allclose(logprob2, logprob2_ref, atol=2e-2, rtol=2e-2)

    print("KERNEL_OK")
</pallas_src>

<mosaic_0001>
module attributes {stable_mosaic.version = 11 : i64} {
  func.func @policy_kernel(%arg0: i32, %arg1: memref<16x16xbf16, #tpu.memory_space<vmem>>, %arg2: memref<16x8xf32, #tpu.memory_space<vmem>>, %arg3: memref<16x256xbf16, #tpu.memory_space<vmem>>, %arg4: memref<1x256xf32, #tpu.memory_space<vmem>>, %arg5: memref<256x256xbf16, #tpu.memory_space<vmem>>, %arg6: memref<1x256xf32, #tpu.memory_space<vmem>>, %arg7: memref<256x256xbf16, #tpu.memory_space<vmem>>, %arg8: memref<1x256xf32, #tpu.memory_space<vmem>>, %arg9: memref<256x16xbf16, #tpu.memory_space<vmem>>, %arg10: memref<1x16xf32, #tpu.memory_space<vmem>>, %arg11: memref<16x9xf32, #tpu.memory_space<vmem>>) attributes {dimension_semantics = [#tpu.dimension_semantics<parallel>], iteration_bounds = array<i64: 1>, scalar_prefetch = 0 : i64, scratch_operands = 0 : i64, tpu.core_type = #tpu.core_type<tc>, window_params = [{transform_indices = @transform_0, window_bounds = array<i64: 16, 16>}, {transform_indices = @transform_1, window_bounds = array<i64: 16, 8>}, {pipeline_mode = #tpu.pipeline_mode<synchronous>, transform_indices = @transform_2, window_bounds = array<i64: 16, 256>}, {pipeline_mode = #tpu.pipeline_mode<synchronous>, transform_indices = @transform_3, window_bounds = array<i64: 1, 256>}, {pipeline_mode = #tpu.pipeline_mode<synchronous>, transform_indices = @transform_4, window_bounds = array<i64: 256, 256>}, {pipeline_mode = #tpu.pipeline_mode<synchronous>, transform_indices = @transform_5, window_bounds = array<i64: 1, 256>}, {pipeline_mode = #tpu.pipeline_mode<synchronous>, transform_indices = @transform_6, window_bounds = array<i64: 256, 256>}, {pipeline_mode = #tpu.pipeline_mode<synchronous>, transform_indices = @transform_7, window_bounds = array<i64: 1, 256>}, {pipeline_mode = #tpu.pipeline_mode<synchronous>, transform_indices = @transform_8, window_bounds = array<i64: 256, 16>}, {pipeline_mode = #tpu.pipeline_mode<synchronous>, transform_indices = @transform_9, window_bounds = array<i64: 1, 16>}, {transform_indices = @transform_10, window_bounds = array<i64: 16, 9>}]} {
    %c0 = arith.constant 0 : index
    %c0_0 = arith.constant 0 : index
    %0 = vector.load %arg1[%c0, %c0_0] : memref<16x16xbf16, #tpu.memory_space<vmem>>, vector<16x16xbf16>
    %c0_1 = arith.constant 0 : index
    %c0_2 = arith.constant 0 : index
    %1 = vector.load %arg3[%c0_1, %c0_2] : memref<16x256xbf16, #tpu.memory_space<vmem>>, vector<16x256xbf16>
    %cst = arith.constant dense<0.000000e+00> : vector<16x256xf32>
    %2 = tpu.matmul %0, %1, %cst {dimension_numbers = #tpu.dot_dimension_numbers<[1], [0], [0], [1], [0, 0, 1, 1], [], []>} : vector<16x16xbf16>, vector<16x256xbf16>, vector<16x256xf32> -> vector<16x256xf32>
    %c0_3 = arith.constant 0 : index
    %c0_4 = arith.constant 0 : index
    %3 = vector.load %arg4[%c0_3, %c0_4] : memref<1x256xf32, #tpu.memory_space<vmem>>, vector<1x256xf32>
    %4 = vector.broadcast %3 : vector<1x256xf32> to vector<16x256xf32>
    %5 = arith.addf %2, %4 : vector<16x256xf32>
    %cst_5 = arith.constant 0.000000e+00 : f32
    %6 = vector.broadcast %cst_5 : f32 to vector<16x256xf32>
    %7 = arith.maximumf %5, %6 : vector<16x256xf32>
    %8 = arith.truncf %7 : vector<16x256xf32> to vector<16x256xbf16>
    %c0_6 = arith.constant 0 : index
    %c0_7 = arith.constant 0 : index
    %9 = vector.load %arg5[%c0_6, %c0_7] : memref<256x256xbf16, #tpu.memory_space<vmem>>, vector<256x256xbf16>
    %cst_8 = arith.constant dense<0.000000e+00> : vector<16x256xf32>
    %10 = tpu.matmul %8, %9, %cst_8 {dimension_numbers = #tpu.dot_dimension_numbers<[1], [0], [0], [1], [0, 0, 1, 1], [], []>} : vector<16x256xbf16>, vector<256x256xbf16>, vector<16x256xf32> -> vector<16x256xf32>
    %c0_9 = arith.constant 0 : index
    %c0_10 = arith.constant 0 : index
    %11 = vector.load %arg6[%c0_9, %c0_10] : memref<1x256xf32, #tpu.memory_space<vmem>>, vector<1x256xf32>
    %12 = vector.broadcast %11 : vector<1x256xf32> to vector<16x256xf32>
    %13 = arith.addf %10, %12 : vector<16x256xf32>
    %cst_11 = arith.constant 0.000000e+00 : f32
    %14 = vector.broadcast %cst_11 : f32 to vector<16x256xf32>
    %15 = arith.maximumf %13, %14 : vector<16x256xf32>
    %16 = arith.truncf %15 : vector<16x256xf32> to vector<16x256xbf16>
    %c0_12 = arith.constant 0 : index
    %c0_13 = arith.constant 0 : index
    %17 = vector.load %arg7[%c0_12, %c0_13] : memref<256x256xbf16, #tpu.memory_space<vmem>>, vector<256x256xbf16>
    %cst_14 = arith.constant dense<0.000000e+00> : vector<16x256xf32>
    %18 = tpu.matmul %16, %17, %cst_14 {dimension_numbers = #tpu.dot_dimension_numbers<[1], [0], [0], [1], [0, 0, 1, 1], [], []>} : vector<16x256xbf16>, vector<256x256xbf16>, vector<16x256xf32> -> vector<16x256xf32>
    %c0_15 = arith.constant 0 : index
    %c0_16 = arith.constant 0 : index
    %19 = vector.load %arg8[%c0_15, %c0_16] : memref<1x256xf32, #tpu.memory_space<vmem>>, vector<1x256xf32>
    %20 = vector.broadcast %19 : vector<1x256xf32> to vector<16x256xf32>
    %21 = arith.addf %18, %20 : vector<16x256xf32>
    %cst_17 = arith.constant 0.000000e+00 : f32
    %22 = vector.broadcast %cst_17 : f32 to vector<16x256xf32>
    %23 = arith.maximumf %21, %22 : vector<16x256xf32>
    %24 = arith.truncf %23 : vector<16x256xf32> to vector<16x256xbf16>
    %c0_18 = arith.constant 0 : index
    %c0_19 = arith.constant 0 : index
    %25 = vector.load %arg9[%c0_18, %c0_19] : memref<256x16xbf16, #tpu.memory_space<vmem>>, vector<256x16xbf16>
    %cst_20 = arith.constant dense<0.000000e+00> : vector<16x16xf32>
    %26 = tpu.matmul %24, %25, %cst_20 {dimension_numbers = #tpu.dot_dimension_numbers<[1], [0], [0], [1], [0, 0, 1, 1], [], []>} : vector<16x256xbf16>, vector<256x16xbf16>, vector<16x16xf32> -> vector<16x16xf32>
    %c0_21 = arith.constant 0 : index
    %c0_22 = arith.constant 0 : index
    %27 = vector.load %arg10[%c0_21, %c0_22] : memref<1x16xf32, #tpu.memory_space<vmem>>, vector<1x16xf32>
    %28 = vector.broadcast %27 : vector<1x16xf32> to vector<16x16xf32>
    %29 = arith.addf %26, %28 : vector<16x16xf32>
    %30 = vector.extract_strided_slice %29 {offsets = [0, 0], sizes = [16, 8], strides = [1, 1]} : vector<16x16xf32> to vector<16x8xf32>
    %31 = vector.extract_strided_slice %29 {offsets = [0, 8], sizes = [16, 8], strides = [1, 1]} : vector<16x16xf32> to vector<16x8xf32>
    %cst_23 = arith.constant 2.000000e-10 : f32
    %cst_24 = arith.constant 1.000000e+01 : f32
    %32 = vector.broadcast %cst_23 : f32 to vector<16x8xf32>
    %33 = arith.maximumf %32, %31 : vector<16x8xf32>
    %34 = vector.broadcast %cst_24 : f32 to vector<16x8xf32>
    %35 = arith.minimumf %34, %33 : vector<16x8xf32>
    %c0_25 = arith.constant 0 : index
    %c0_26 = arith.constant 0 : index
    %36 = vector.load %arg2[%c0_25, %c0_26] : memref<16x8xf32, #tpu.memory_space<vmem>>, vector<16x8xf32>
    %37 = arith.mulf %35, %36 : vector<16x8xf32>
    %38 = arith.addf %30, %37 : vector<16x8xf32>
    %39 = math.tanh %38 : vector<16x8xf32>
    %cst_27 = arith.constant 2.000000e+00 : f32
    %40 = vector.broadcast %cst_27 : f32 to vector<16x8xf32>
    %41 = arith.mulf %40, %39 : vector<16x8xf32>
    %c0_28 = arith.constant 0 : index
    %c0_29 = arith.constant 0 : index
    %42 = vector.load %arg11[%c0_28, %c0_29] : memref<16x9xf32, #tpu.memory_space<vmem>>, vector<16x8xf32>
    tpu.vector_store %arg11[%c0_28, %c0_29], %41 {strides = array<i32>} : memref<16x9xf32, #tpu.memory_space<vmem>>, vector<16x8xf32>,
    %cst_30 = arith.constant -5.000000e-01 : f32
    %43 = vector.broadcast %cst_30 : f32 to vector<16x8xf32>
    %44 = arith.mulf %43, %36 : vector<16x8xf32>
    %45 = arith.mulf %44, %36 : vector<16x8xf32>
    %46 = math.log %35 : vector<16x8xf32>
    %47 = arith.subf %45, %46 : vector<16x8xf32>
    %cst_31 = arith.constant 2.000000e+00 : f32
    %48 = vector.broadcast %cst_31 : f32 to vector<16x8xf32>
    %49 = arith.mulf %48, %38 : vector<16x8xf32>
    %50 = arith.addf %47, %49 : vector<16x8xf32>
    %cst_32 = arith.constant -2.000000e+00 : f32
    %51 = vector.broadcast %cst_32 : f32 to vector<16x8xf32>
    %52 = arith.mulf %51, %38 : vector<16x8xf32>
    %cst_33 = arith.constant 0.000000e+00 : f32
    %53 = vector.broadcast %cst_33 : f32 to vector<16x8xf32>
    %54 = arith.maximumf %52, %53 : vector<16x8xf32>
    %55 = math.absf %52 : vector<16x8xf32>
    %cst_34 = arith.constant 0.000000e+00 : f32
    %56 = vector.broadcast %cst_34 : f32 to vector<16x8xf32>
    %57 = arith.subf %56, %55 : vector<16x8xf32>
    %58 = math.exp %57 : vector<16x8xf32>
    %59 = math.log1p %58 : vector<16x8xf32>
    %60 = arith.addf %54, %59 : vector<16x8xf32>
    %cst_35 = arith.constant 2.000000e+00 : f32
    %61 = vector.broadcast %cst_35 : f32 to vector<16x8xf32>
    %62 = arith.mulf %61, %60 : vector<16x8xf32>
    %63 = arith.addf %50, %62 : vector<16x8xf32>
    %cst_36 = arith.constant dense<0.000000e+00> : vector<16xf32>
    %64 = vector.multi_reduction <add>, %63, %cst_36 [1] : vector<16x8xf32> to vector<16xf32>
    %65 = vector.shape_cast %64 : vector<16xf32> to vector<16x1xf32>
    %cst_37 = arith.constant -18.441864 : f32
    %66 = vector.broadcast %cst_37 : f32 to vector<16x1xf32>
    %67 = arith.addf %65, %66 : vector<16x1xf32>
    %c0_38 = arith.constant 0 : index
    %c8 = arith.constant 8 : index
    %68 = vector.load %arg11[%c0_38, %c8] : memref<16x9xf32, #tpu.memory_space<vmem>>, vector<16x1xf32>
    tpu.vector_store %arg11[%c0_38, %c8], %67 {strides = array<i32>} : memref<16x9xf32, #tpu.memory_space<vmem>>, vector<16x1xf32>,
    return
  }
  func.func @transform_0(%arg0: i32) -> (i32, i32) {
    %c0_i32 = arith.constant 0 : i32
    %c0_i32_0 = arith.constant 0 : i32
    return %arg0, %c0_i32 : i32, i32
  }
  func.func @transform_1(%arg0: i32) -> (i32, i32) {
    %c0_i32 = arith.constant 0 : i32
    %c0_i32_0 = arith.constant 0 : i32
    return %arg0, %c0_i32 : i32, i32
  }
  func.func @transform_2(%arg0: i32) -> (i32, i32) {
    %c0_i32 = arith.constant 0 : i32
    %c0_i32_0 = arith.constant 0 : i32
    %c0_i32_1 = arith.constant 0 : i32
    return %c0_i32, %c0_i32_0 : i32, i32
  }
  func.func @transform_3(%arg0: i32) -> (i32, i32) {
    %c0_i32 = arith.constant 0 : i32
    %c0_i32_0 = arith.constant 0 : i32
    %c0_i32_1 = arith.constant 0 : i32
    return %c0_i32, %c0_i32_0 : i32, i32
  }
  func.func @transform_4(%arg0: i32) -> (i32, i32) {
    %c0_i32 = arith.constant 0 : i32
    %c0_i32_0 = arith.constant 0 : i32
    %c0_i32_1 = arith.constant 0 : i32
    return %c0_i32, %c0_i32_0 : i32, i32
  }
  func.func @transform_5(%arg0: i32) -> (i32, i32) {
    %c0_i32 = arith.constant 0 : i32
    %c0_i32_0 = arith.constant 0 : i32
    %c0_i32_1 = arith.constant 0 : i32
    return %c0_i32, %c0_i32_0 : i32, i32
  }
  func.func @transform_6(%arg0: i32) -> (i32, i32) {
    %c0_i32 = arith.constant 0 : i32
    %c0_i32_0 = arith.constant 0 : i32
    %c0_i32_1 = arith.constant 0 : i32
    return %c0_i32, %c0_i32_0 : i32, i32
  }
  func.func @transform_7(%arg0: i32) -> (i32, i32) {
    %c0_i32 = arith.constant 0 : i32
    %c0_i32_0 = arith.constant 0 : i32
    %c0_i32_1 = arith.constant 0 : i32
    return %c0_i32, %c0_i32_0 : i32, i32
  }
  func.func @transform_8(%arg0: i32) -> (i32, i32) {
    %c0_i32 = arith.constant 0 : i32
    %c0_i32_0 = arith.constant 0 : i32
    %c0_i32_1 = arith.constant 0 : i32
    return %c0_i32, %c0_i32_0 : i32, i32
  }
  func.func @transform_9(%arg0: i32) -> (i32, i32) {
    %c0_i32 = arith.constant 0 : i32
    %c0_i32_0 = arith.constant 0 : i32
    %c0_i32_1 = arith.constant 0 : i32
    return %c0_i32, %c0_i32_0 : i32, i32
  }
  func.func @transform_10(%arg0: i32) -> (i32, i32) {
    %c0_i32 = arith.constant 0 : i32
    %c0_i32_0 = arith.constant 0 : i32
    return %arg0, %c0_i32 : i32, i32
  }
}

</mosaic_0001>

<llo_original>
// kernel: tpu_custom_call.1
$region0: #{tpu_custom_call.1}
  #allocation0 [shape = 'u32[]', space=smem, size = 0x4, offset = 0x4, fixed_abs, tag = 'smem constant byte address 0x4 - core index']
  #allocation1 [shape = 'u32[72,128]{1,0:T(1,128)}', space=vmem, size = 0x9000, scoped, tag = 'internal scratch']
  %s0 = inlined_call_operand.vmem [shape: bf16[16,16], index: 0, kind: input, shape index: {}]
  %s1 = inlined_call_operand.vmem [shape: f32[16,8], index: 1, kind: input, shape index: {}]
  %s2 = inlined_call_operand.vmem [shape: bf16[16,256], index: 2, kind: input, shape index: {}]
  %s3 = inlined_call_operand.vmem [shape: f32[1,256], index: 3, kind: input, shape index: {}]
  %s4 = inlined_call_operand.hbm [shape: bf16[256,256], index: 4, kind: input, shape index: {}]
  %s5 = inlined_call_operand.vmem [shape: f32[1,256], index: 5, kind: input, shape index: {}]
  %s6 = inlined_call_operand.hbm [shape: bf16[256,256], index: 6, kind: input, shape index: {}]
  %s7 = inlined_call_operand.vmem [shape: f32[1,256], index: 7, kind: input, shape index: {}]
  %s8 = inlined_call_operand.vmem [shape: bf16[256,16], index: 8, kind: input, shape index: {}]
  %s9 = inlined_call_operand.vmem [shape: f32[1,16], index: 9, kind: input, shape index: {}]
  %s10 = inlined_call_operand.hbm [shape: f32[16,9], index: 10, kind: output, shape index: {}]
  %s11 = sld [smem:[#allocation0]]
  $region58: #{tpu_custom_call.1} parent=0
    _
  %s13 = ssub.s32 1, %s11
  %s14 = scalar_select 0, %s13, %s11
  $region1: #{tpu_custom_call.1} parent=0
    #allocation2 [shape = 'u8[131072]{0}', space=vmem, size = 0x20000, scoped, tag = 'input window, operand 4, single buffered']
    #allocation3 [shape = 's32[1]{0}', space=sflag, size = 0x4, scoped, tag = 'scoped memory for tpu_custom_call.1']
    #allocation4 [shape = 's32[1]{0}', space=sflag, size = 0x4, scoped, tag = 'scoped memory for tpu_custom_call.1']
    #allocation5 [shape = 'u8[131072]{0}', space=vmem, size = 0x20000, scoped, tag = 'input window, operand 6, single buffered']
    #allocation6 [shape = 's32[1]{0}', space=sflag, size = 0x4, scoped, tag = 'scoped memory for tpu_custom_call.1']
    #allocation7 [shape = 'u8[8192]{0}', space=vmem, size = 0x2000, scoped, tag = 'output window, operand 0, single buffered']
    %15 = vsyncpa [#allocation3], 0
    %16 = vsyncpa [#allocation6], 0
    %17 = vsyncpa [#allocation4], 0
    // Predicated region
    $region2: #{tpu_custom_call.1} parent=1 // pred_check
      _
    $region3: #{tpu_custom_call.1} parent=1 // pred_check_branch
      %19 = sbr.rel (0) target = $region5
    $region4: #{tpu_custom_call.1} parent=1 // pred_region
      _
    $region5: #{tpu_custom_call.1} parent=1 // pred_fallthru
      _
    // Predicated region
    $region6: #{tpu_custom_call.1} parent=1 // pred_check
      _
    $region7: #{tpu_custom_call.1} parent=1 // pred_check_branch
      %21 = sbr.rel (0) target = $region9
    $region8: #{tpu_custom_call.1} parent=1 // pred_region
      _
    $region9: #{tpu_custom_call.1} parent=1 // pred_fallthru
      _
    // Predicated region
    $region10: #{tpu_custom_call.1} parent=1 // pred_check
      _
    $region11: #{tpu_custom_call.1} parent=1 // pred_check_branch
      %23 = sbr.rel (0) target = $region13
    $region12: #{tpu_custom_call.1} parent=1 // pred_region
      _
    $region13: #{tpu_custom_call.1} parent=1 // pred_fallthru
      _
    // Predicated region
    $region14: #{tpu_custom_call.1} parent=1 // pred_check
      _
    $region15: #{tpu_custom_call.1} parent=1 // pred_check_branch
      %25 = sbr.rel (0) target = $region17
    $region16: #{tpu_custom_call.1} parent=1 // pred_region
      _
    $region17: #{tpu_custom_call.1} parent=1 // pred_fallthru
      _
    // Predicated region
    $region18: #{tpu_custom_call.1} parent=1 // pred_check
      _
    $region19: #{tpu_custom_call.1} parent=1 // pred_check_branch
      %27 = sbr.rel (0) target = $region21
    $region20: #{tpu_custom_call.1} parent=1 // pred_region
      %29 = vsyncadd [#allocation3], 0
      %s30 = sshll.u32 %s4, 4
      %s31 = int_to_ptr.hbm [resolvable:$true] %s30
      %s32 = sshll.u32 [#allocation2], 4
      %s33 = int_to_ptr.vmem [resolvable:$true] %s32
      %38 = dma.hbm_to_vmem [thread:$0]  %s31, 4096, %s33, [#allocation3], 128, 128, 8
    $region21: #{tpu_custom_call.1} parent=1 // pred_fallthru
      _
    // Predicated region
    $region22: #{tpu_custom_call.1} parent=1 // pred_check
      _
    $region23: #{tpu_custom_call.1} parent=1 // pred_check_branch
      %40 = sbr.rel (0) target = $region25
    $region24: #{tpu_custom_call.1} parent=1 // pred_region
      _
    $region25: #{tpu_custom_call.1} parent=1 // pred_fallthru
      _
    // Predicated region
    $region26: #{tpu_custom_call.1} parent=1 // pred_check
      _
    $region27: #{tpu_custom_call.1} parent=1 // pred_check_branch
      %42 = sbr.rel (0) target = $region29
    $region28: #{tpu_custom_call.1} parent=1 // pred_region
      %44 = vsyncadd [#allocation6], 0
      %s45 = sshll.u32 %s6, 4
      %s46 = int_to_ptr.hbm [resolvable:$true] %s45
      %s47 = sshll.u32 [#allocation5], 4
      %s48 = int_to_ptr.vmem [resolvable:$true] %s47
      %53 = dma.hbm_to_vmem [thread:$0]  %s46, 4096, %s48, [#allocation6], 128, 128, 8
    $region29: #{tpu_custom_call.1} parent=1 // pred_fallthru
      _
    // Predicated region
    $region30: #{tpu_custom_call.1} parent=1 // pred_check
      _
    $region31: #{tpu_custom_call.1} parent=1 // pred_check_branch
      %55 = sbr.rel (0) target = $region33
    $region32: #{tpu_custom_call.1} parent=1 // pred_region
      _
    $region33: #{tpu_custom_call.1} parent=1 // pred_fallthru
      _
    // Predicated region
    $region34: #{tpu_custom_call.1} parent=1 // pred_check
      _
    $region35: #{tpu_custom_call.1} parent=1 // pred_check_branch
      %57 = sbr.rel (0) target = $region37
    $region36: #{tpu_custom_call.1} parent=1 // pred_region
      _
    $region37: #{tpu_custom_call.1} parent=1 // pred_fallthru
      _
    // Predicated region
    $region38: #{tpu_custom_call.1} parent=1 // pred_check
      _
    $region39: #{tpu_custom_call.1} parent=1 // pred_check_branch
      %59 = sbr.rel (0) target = $region41
    $region40: #{tpu_custom_call.1} parent=1 // pred_region
      _
    $region41: #{tpu_custom_call.1} parent=1 // pred_fallthru
      _
    // Predicated region
    $region42: #{tpu_custom_call.1} parent=1 // pred_check
      _
    $region43: #{tpu_custom_call.1} parent=1 // pred_check_branch
      %61 = sbr.rel (0) target = $region45
    $region44: #{tpu_custom_call.1} parent=1 // pred_region
      %63 = dma.done [#allocation3], 4096
    $region45: #{tpu_custom_call.1} parent=1 // pred_fallthru
      _
    // Predicated region
    $region46: #{tpu_custom_call.1} parent=1 // pred_check
      _
    $region47: #{tpu_custom_call.1} parent=1 // pred_check_branch
      %65 = sbr.rel (0) target = $region49
    $region48: #{tpu_custom_call.1} parent=1 // pred_region
      %67 = dma.done [#allocation6], 4096
    $region49: #{tpu_custom_call.1} parent=1 // pred_fallthru
      _
    %v69 = vld [vmem:[%s0] sm:$0xf]
    %v70 = vld [vmem:[%s0 + $0x4] sm:$0xf]
    %v71 = vld [vmem:[%s2] sm:$0xff]
    %v72 = vld [vmem:[%s2 + $0x8] sm:$0xff]
    %v73 = vld [vmem:[%s3] sm:$0x3]
    %v75 = vperm.slane %v73, 0
    %v76 = vperm.slane %v73, 1
    %v81 = vunpack.c.l.b16 %v69
    %v82 = vunpack.c.l.b16 %v70
    %v83 = vpack.c.b16 %v82, %v81
    %v86 = vunpack.c.l.b16 %v71
    %v87 = vunpack.c.h.b16 %v71
    %v88 = vunpack.c.l.b16 %v72
    %v89 = vunpack.c.h.b16 %v72
    %v90 = vpack.c.b16 %v88, %v86
    %v91 = vpack.c.b16 %v89, %v87
    %vm94 = vcmask 130048
    %v96 = vsel %vm94, %v83, 0
    %98 = vmatpush.bf16.msra.mxu0 0
    %99 = vmatpush.bf16.msra.mxu0 0
    %100 = vmatpush.bf16.msra.mxu0 0
    %101 = vmatpush.bf16.msra.mxu0 0
    %102 = vmatpush.bf16.msra.mxu0 0
    %103 = vmatpush.bf16.msra.mxu0 0
    %104 = vmatpush.bf16.msra.mxu0 0
    %105 = vmatpush.bf16.msra.mxu0 %v90
    %106 = vmatmul.bf16.gmra.mxu0 %v96
    %v107 = vpop.f32.mrf.mxu0
    %v108 = vadd.f32 %v75, %v107
    %v109 = vpop.f32.mrf.mxu0
    %v110 = vadd.f32 %v75, %v109
    %111 = vdwg.mxu0
    %112 = vmatpush.bf16.msra.mxu0 0
    %113 = vmatpush.bf16.msra.mxu0 0
    %114 = vmatpush.bf16.msra.mxu0 0
    %115 = vmatpush.bf16.msra.mxu0 0
    %116 = vmatpush.bf16.msra.mxu0 0
    %117 = vmatpush.bf16.msra.mxu0 0
    %118 = vmatpush.bf16.msra.mxu0 0
    %119 = vmatpush.bf16.msra.mxu0 %v91
    %120 = vmatmul.bf16.gmra.mxu0 %v96
    %v121 = vpop.f32.mrf.mxu0
    %v122 = vadd.f32 %v76, %v121
    %v123 = vpop.f32.mrf.mxu0
    %v124 = vadd.f32 %v76, %v123
    %125 = vdwg.mxu0
    %v126 = vmax.f32 %v108, 0.0
    %v127 = vmax.f32 %v122, 0.0
    %v128 = vmax.f32 %v110, 0.0
    %v129 = vmax.f32 %v124, 0.0
    %v130 = vpack.c.bf16 %v128, %v126
    %v131 = vpack.c.bf16 %v129, %v127
    %v132 = vld [vmem:[#allocation2] sm:$0xff]
    %v133 = vld [vmem:[#allocation2 + $0x8] sm:$0xff]
    %v134 = vld [vmem:[#allocation2 + $0x10] sm:$0xff]
    %v135 = vld [vmem:[#allocation2 + $0x18] sm:$0xff]
    %v136 = vld [vmem:[#allocation2 + $0x20] sm:$0xff]
    %v137 = vld [vmem:[#allocation2 + $0x28] sm:$0xff]
    %v138 = vld [vmem:[#allocation2 + $0x30] sm:$0xff]
    %v139 = vld [vmem:[#allocation2 + $0x38] sm:$0xff]
    %v140 = vld [vmem:[#allocation2 + $0x40] sm:$0xff]
    %v141 = vld [vmem:[#allocation2 + $0x48] sm:$0xff]
    %v142 = vld [vmem:[#allocation2 + $0x50] sm:$0xff]
    %v143 = vld [vmem:[#allocation2 + $0x58] sm:$0xff]
    %v144 = vld [vmem:[#allocation2 + $0x60] sm:$0xff]
    %v145 = vld [vmem:[#allocation2 + $0x68] sm:$0xff]
    %v146 = vld [vmem:[#allocation2 + $0x70] sm:$0xff]
    %v147 = vld [vmem:[#allocation2 + $0x78] sm:$0xff]
    %v148 = vld [vmem:[#allocation2 + $0x80] sm:$0xff]
    %v149 = vld [vmem:[#allocation2 + $0x88] sm:$0xff]
    %v150 = vld [vmem:[#allocation2 + $0x90] sm:$0xff]
    %v151 = vld [vmem:[#allocation2 + $0x98] sm:$0xff]
    %v152 = vld [vmem:[#allocation2 + $0xa0] sm:$0xff]
    %v153 = vld [vmem:[#allocation2 + $0xa8] sm:$0xff]
    %v154 = vld [vmem:[#allocation2 + $0xb0] sm:$0xff]
    %v155 = vld [vmem:[#allocation2 + $0xb8] sm:$0xff]
    %v156 = vld [vmem:[#allocation2 + $0xc0] sm:$0xff]
    %v157 = vld [vmem:[#allocation2 + $0xc8] sm:$0xff]
    %v158 = vld [vmem:[#allocation2 + $0xd0] sm:$0xff]
    %v159 = vld [vmem:[#allocation2 + $0xd8] sm:$0xff]
    %v160 = vld [vmem:[#allocation2 + $0xe0] sm:$0xff]
    %v161 = vld [vmem:[#allocation2 + $0xe8] sm:$0xff]
    %v162 = vld [vmem:[#allocation2 + $0xf0] sm:$0xff]
    %v163 = vld [vmem:[#allocation2 + $0xf8] sm:$0xff]
    %v164 = vld [vmem:[%s5] sm:$0x3]
    %v166 = vperm.slane %v164, 0
    %v167 = vperm.slane %v164, 1
    %v202 = vunpack.c.l.b16 %v132
    %v203 = vunpack.c.h.b16 %v132
    %v204 = vunpack.c.l.b16 %v133
    %v205 = vunpack.c.h.b16 %v133
    %v206 = vunpack.c.l.b16 %v134
    %v207 = vunpack.c.h.b16 %v134
    %v208 = vunpack.c.l.b16 %v135
    %v209 = vunpack.c.h.b16 %v135
    %v210 = vunpack.c.l.b16 %v136
    %v211 = vunpack.c.h.b16 %v136
    %v212 = vunpack.c.l.b16 %v137
    %v213 = vunpack.c.h.b16 %v137
    %v214 = vunpack.c.l.b16 %v138
    %v215 = vunpack.c.h.b16 %v138
    %v216 = vunpack.c.l.b16 %v139
    %v217 = vunpack.c.h.b16 %v139
    %v218 = vunpack.c.l.b16 %v140
    %v219 = vunpack.c.h.b16 %v140
    %v220 = vunpack.c.l.b16 %v141
    %v221 = vunpack.c.h.b16 %v141
    %v222 = vunpack.c.l.b16 %v142
    %v223 = vunpack.c.h.b16 %v142
    %v224 = vunpack.c.l.b16 %v143
    %v225 = vunpack.c.h.b16 %v143
    %v226 = vunpack.c.l.b16 %v144
    %v227 = vunpack.c.h.b16 %v144
    %v228 = vunpack.c.l.b16 %v145
    %v229 = vunpack.c.h.b16 %v145
    %v230 = vunpack.c.l.b16 %v146
    %v231 = vunpack.c.h.b16 %v146
    %v232 = vunpack.c.l.b16 %v147
    %v233 = vunpack.c.h.b16 %v147
    %v234 = vunpack.c.l.b16 %v148
    %v235 = vunpack.c.h.b16 %v148
    %v236 = vunpack.c.l.b16 %v149
    %v237 = vunpack.c.h.b16 %v149
    %v238 = vunpack.c.l.b16 %v150
    %v239 = vunpack.c.h.b16 %v150
    %v240 = vunpack.c.l.b16 %v151
    %v241 = vunpack.c.h.b16 %v151
    %v242 = vunpack.c.l.b16 %v152
    %v243 = vunpack.c.h.b16 %v152
    %v244 = vunpack.c.l.b16 %v153
    %v245 = vunpack.c.h.b16 %v153
    %v246 = vunpack.c.l.b16 %v154
    %v247 = vunpack.c.h.b16 %v154
    %v248 = vunpack.c.l.b16 %v155
    %v249 = vunpack.c.h.b16 %v155
    %v250 = vunpack.c.l.b16 %v156
    %v251 = vunpack.c.h.b16 %v156
    %v252 = vunpack.c.l.b16 %v157
    %v253 = vunpack.c.h.b16 %v157
    %v254 = vunpack.c.l.b16 %v158
    %v255 = vunpack.c.h.b16 %v158
    %v256 = vunpack.c.l.b16 %v159
    %v257 = vunpack.c.h.b16 %v159
    %v258 = vunpack.c.l.b16 %v160
    %v259 = vunpack.c.h.b16 %v160
    %v260 = vunpack.c.l.b16 %v161
    %v261 = vunpack.c.h.b16 %v161
    %v262 = vunpack.c.l.b16 %v162
    %v263 = vunpack.c.h.b16 %v162
    %v264 = vunpack.c.l.b16 %v163
    %v265 = vunpack.c.h.b16 %v163
    %v266 = vpack.c.b16 %v204, %v202
    %v267 = vpack.c.b16 %v205, %v203
    %v268 = vpack.c.b16 %v208, %v206
    %v269 = vpack.c.b16 %v209, %v207
    %v270 = vpack.c.b16 %v212, %v210
    %v271 = vpack.c.b16 %v213, %v211
    %v272 = vpack.c.b16 %v216, %v214
    %v273 = vpack.c.b16 %v217, %v215
    %v274 = vpack.c.b16 %v220, %v218
    %v275 = vpack.c.b16 %v221, %v219
    %v276 = vpack.c.b16 %v224, %v222
    %v277 = vpack.c.b16 %v225, %v223
    %v278 = vpack.c.b16 %v228, %v226
    %v279 = vpack.c.b16 %v229, %v227
    %v280 = vpack.c.b16 %v232, %v230
    %v281 = vpack.c.b16 %v233, %v231
    %v282 = vpack.c.b16 %v236, %v234
    %v283 = vpack.c.b16 %v237, %v235
    %v284 = vpack.c.b16 %v240, %v238
    %v285 = vpack.c.b16 %v241, %v239
    %v286 = vpack.c.b16 %v244, %v242
    %v287 = vpack.c.b16 %v245, %v243
    %v288 = vpack.c.b16 %v248, %v246
    %v289 = vpack.c.b16 %v249, %v247
    %v290 = vpack.c.b16 %v252, %v250
    %v291 = vpack.c.b16 %v253, %v251
    %v292 = vpack.c.b16 %v256, %v254
    %v293 = vpack.c.b16 %v257, %v255
    %v294 = vpack.c.b16 %v260, %v258
    %v295 = vpack.c.b16 %v261, %v259
    %v296 = vpack.c.b16 %v264, %v262
    %v297 = vpack.c.b16 %v265, %v263
    %330 = vmatpush.bf16.msra.mxu0 %v280
    %331 = vmatpush.bf16.msra.mxu0 %v278
    %332 = vmatpush.bf16.msra.mxu0 %v276
    %333 = vmatpush.bf16.msra.mxu0 %v274
    %334 = vmatpush.bf16.msra.mxu0 %v272
    %335 = vmatpush.bf16.msra.mxu0 %v270
    %336 = vmatpush.bf16.msra.mxu0 %v268
    %337 = vmatpush.bf16.msra.mxu0 %v266
    %338 = vmatmul.bf16.gmra.mxu0 %v130
    %v339 = vpop.f32.mrf.mxu0
    %v340 = vadd.f32 %v166, %v339
    %v341 = vpop.f32.mrf.mxu0
    %v342 = vadd.f32 %v166, %v341
    %343 = vdwg.mxu0
    %344 = vmatpush.bf16.msra.mxu0 %v296
    %345 = vmatpush.bf16.msra.mxu0 %v294
    %346 = vmatpush.bf16.msra.mxu0 %v292
    %347 = vmatpush.bf16.msra.mxu0 %v290
    %348 = vmatpush.bf16.msra.mxu0 %v288
    %349 = vmatpush.bf16.msra.mxu0 %v286
    %350 = vmatpush.bf16.msra.mxu0 %v284
    %351 = vmatpush.bf16.msra.mxu0 %v282
    %352 = vmatmul.bf16.gmra.mxu0 %v131
    %v353 = vpop.f32.mrf.mxu0
    %v354 = vadd.f32 %v340, %v353
    %v355 = vpop.f32.mrf.mxu0
    %v356 = vadd.f32 %v342, %v355
    %357 = vdwg.mxu0
    %358 = vmatpush.bf16.msra.mxu0 %v281
    %359 = vmatpush.bf16.msra.mxu0 %v279
    %360 = vmatpush.bf16.msra.mxu0 %v277
    %361 = vmatpush.bf16.msra.mxu0 %v275
    %362 = vmatpush.bf16.msra.mxu0 %v273
    %363 = vmatpush.bf16.msra.mxu0 %v271
    %364 = vmatpush.bf16.msra.mxu0 %v269
    %365 = vmatpush.bf16.msra.mxu0 %v267
    %366 = vmatmul.bf16.gmra.mxu0 %v130
    %v367 = vpop.f32.mrf.mxu0
    %v368 = vadd.f32 %v167, %v367
    %v369 = vpop.f32.mrf.mxu0
    %v370 = vadd.f32 %v167, %v369
    %371 = vdwg.mxu0
    %372 = vmatpush.bf16.msra.mxu0 %v297
    %373 = vmatpush.bf16.msra.mxu0 %v295
    %374 = vmatpush.bf16.msra.mxu0 %v293
    %375 = vmatpush.bf16.msra.mxu0 %v291
    %376 = vmatpush.bf16.msra.mxu0 %v289
    %377 = vmatpush.bf16.msra.mxu0 %v287
    %378 = vmatpush.bf16.msra.mxu0 %v285
    %379 = vmatpush.bf16.msra.mxu0 %v283
    %380 = vmatmul.bf16.gmra.mxu0 %v131
    %v381 = vpop.f32.mrf.mxu0
    %v382 = vadd.f32 %v368, %v381
    %v383 = vpop.f32.mrf.mxu0
    %v384 = vadd.f32 %v370, %v383
    %385 = vdwg.mxu0
    %v386 = vmax.f32 %v354, 0.0
    %v387 = vmax.f32 %v382, 0.0
    %v388 = vmax.f32 %v356, 0.0
    %v389 = vmax.f32 %v384, 0.0
    %v390 = vpack.c.bf16 %v388, %v386
    %v391 = vpack.c.bf16 %v389, %v387
    %v392 = vld [vmem:[#allocation5] sm:$0xff]
    %v393 = vld [vmem:[#allocation5 + $0x8] sm:$0xff]
    %v394 = vld [vmem:[#allocation5 + $0x10] sm:$0xff]
    %v395 = vld [vmem:[#allocation5 + $0x18] sm:$0xff]
    %v396 = vld [vmem:[#allocation5 + $0x20] sm:$0xff]
    %v397 = vld [vmem:[#allocation5 + $0x28] sm:$0xff]
    %v398 = vld [vmem:[#allocation5 + $0x30] sm:$0xff]
    %v399 = vld [vmem:[#allocation5 + $0x38] sm:$0xff]
    %v400 = vld [vmem:[#allocation5 + $0x40] sm:$0xff]
    %v401 = vld [vmem:[#allocation5 + $0x48] sm:$0xff]
    %v402 = vld [vmem:[#allocation5 + $0x50] sm:$0xff]
    %v403 = vld [vmem:[#allocation5 + $0x58] sm:$0xff]
    %v404 = vld [vmem:[#allocation5 + $0x60] sm:$0xff]
    %v405 = vld [vmem:[#allocation5 + $0x68] sm:$0xff]
    %v406 = vld [vmem:[#allocation5 + $0x70] sm:$0xff]
    %v407 = vld [vmem:[#allocation5 + $0x78] sm:$0xff]
    %v408 = vld [vmem:[#allocation5 + $0x80] sm:$0xff]
    %v409 = vld [vmem:[#allocation5 + $0x88] sm:$0xff]
    %v410 = vld [vmem:[#allocation5 + $0x90] sm:$0xff]
    %v411 = vld [vmem:[#allocation5 + $0x98] sm:$0xff]
    %v412 = vld [vmem:[#allocation5 + $0xa0] sm:$0xff]
    %v413 = vld [vmem:[#allocation5 + $0xa8] sm:$0xff]
    %v414 = vld [vmem:[#allocation5 + $0xb0] sm:$0xff]
    %v415 = vld [vmem:[#allocation5 + $0xb8] sm:$0xff]
    %v416 = vld [vmem:[#allocation5 + $0xc0] sm:$0xff]
    %v417 = vld [vmem:[#allocation5 + $0xc8] sm:$0xff]
    %v418 = vld [vmem:[#allocation5 + $0xd0] sm:$0xff]
    %v419 = vld [vmem:[#allocation5 + $0xd8] sm:$0xff]
    %v420 = vld [vmem:[#allocation5 + $0xe0] sm:$0xff]
    %v421 = vld [vmem:[#allocation5 + $0xe8] sm:$0xff]
    %v422 = vld [vmem:[#allocation5 + $0xf0] sm:$0xff]
    %v423 = vld [vmem:[#allocation5 + $0xf8] sm:$0xff]
    %v424 = vld [vmem:[%s7] sm:$0x3]
    %v426 = vperm.slane %v424, 0
    %v427 = vperm.slane %v424, 1
    %v462 = vunpack.c.l.b16 %v392
    %v463 = vunpack.c.h.b16 %v392
    %v464 = vunpack.c.l.b16 %v393
    %v465 = vunpack.c.h.b16 %v393
    %v466 = vunpack.c.l.b16 %v394
    %v467 = vunpack.c.h.b16 %v394
    %v468 = vunpack.c.l.b16 %v395
    %v469 = vunpack.c.h.b16 %v395
    %v470 = vunpack.c.l.b16 %v396
    %v471 = vunpack.c.h.b16 %v396
    %v472 = vunpack.c.l.b16 %v397
    %v473 = vunpack.c.h.b16 %v397
    %v474 = vunpack.c.l.b16 %v398
    %v475 = vunpack.c.h.b16 %v398
    %v476 = vunpack.c.l.b16 %v399
    %v477 = vunpack.c.h.b16 %v399
    %v478 = vunpack.c.l.b16 %v400
    %v479 = vunpack.c.h.b16 %v400
    %v480 = vunpack.c.l.b16 %v401
    %v481 = vunpack.c.h.b16 %v401
    %v482 = vunpack.c.l.b16 %v402
    %v483 = vunpack.c.h.b16 %v402
    %v484 = vunpack.c.l.b16 %v403
    %v485 = vunpack.c.h.b16 %v403
    %v486 = vunpack.c.l.b16 %v404
    %v487 = vunpack.c.h.b16 %v404
    %v488 = vunpack.c.l.b16 %v405
    %v489 = vunpack.c.h.b16 %v405
    %v490 = vunpack.c.l.b16 %v406
    %v491 = vunpack.c.h.b16 %v406
    %v492 = vunpack.c.l.b16 %v407
    %v493 = vunpack.c.h.b16 %v407
    %v494 = vunpack.c.l.b16 %v408
    %v495 = vunpack.c.h.b16 %v408
    %v496 = vunpack.c.l.b16 %v409
    %v497 = vunpack.c.h.b16 %v409
    %v498 = vunpack.c.l.b16 %v410
    %v499 = vunpack.c.h.b16 %v410
    %v500 = vunpack.c.l.b16 %v411
    %v501 = vunpack.c.h.b16 %v411
    %v502 = vunpack.c.l.b16 %v412
    %v503 = vunpack.c.h.b16 %v412
    %v504 = vunpack.c.l.b16 %v413
    %v505 = vunpack.c.h.b16 %v413
    %v506 = vunpack.c.l.b16 %v414
    %v507 = vunpack.c.h.b16 %v414
    %v508 = vunpack.c.l.b16 %v415
    %v509 = vunpack.c.h.b16 %v415
    %v510 = vunpack.c.l.b16 %v416
    %v511 = vunpack.c.h.b16 %v416
    %v512 = vunpack.c.l.b16 %v417
    %v513 = vunpack.c.h.b16 %v417
    %v514 = vunpack.c.l.b16 %v418
    %v515 = vunpack.c.h.b16 %v418
    %v516 = vunpack.c.l.b16 %v419
    %v517 = vunpack.c.h.b16 %v419
    %v518 = vunpack.c.l.b16 %v420
    %v519 = vunpack.c.h.b16 %v420
    %v520 = vunpack.c.l.b16 %v421
    %v521 = vunpack.c.h.b16 %v421
    %v522 = vunpack.c.l.b16 %v422
    %v523 = vunpack.c.h.b16 %v422
    %v524 = vunpack.c.l.b16 %v423
    %v525 = vunpack.c.h.b16 %v423
    %v526 = vpack.c.b16 %v464, %v462
    %v527 = vpack.c.b16 %v465, %v463
    %v528 = vpack.c.b16 %v468, %v466
    %v529 = vpack.c.b16 %v469, %v467
    %v530 = vpack.c.b16 %v472, %v470
    %v531 = vpack.c.b16 %v473, %v471
    %v532 = vpack.c.b16 %v476, %v474
    %v533 = vpack.c.b16 %v477, %v475
    %v534 = vpack.c.b16 %v480, %v478
    %v535 = vpack.c.b16 %v481, %v479
    %v536 = vpack.c.b16 %v484, %v482
    %v537 = vpack.c.b16 %v485, %v483
    %v538 = vpack.c.b16 %v488, %v486
    %v539 = vpack.c.b16 %v489, %v487
    %v540 = vpack.c.b16 %v492, %v490
    %v541 = vpack.c.b16 %v493, %v491
    %v542 = vpack.c.b16 %v496, %v494
    %v543 = vpack.c.b16 %v497, %v495
    %v544 = vpack.c.b16 %v500, %v498
    %v545 = vpack.c.b16 %v501, %v499
    %v546 = vpack.c.b16 %v504, %v502
    %v547 = vpack.c.b16 %v505, %v503
    %v548 = vpack.c.b16 %v508, %v506
    %v549 = vpack.c.b16 %v509, %v507
    %v550 = vpack.c.b16 %v512, %v510
    %v551 = vpack.c.b16 %v513, %v511
    %v552 = vpack.c.b16 %v516, %v514
    %v553 = vpack.c.b16 %v517, %v515
    %v554 = vpack.c.b16 %v520, %v518
    %v555 = vpack.c.b16 %v521, %v519
    %v556 = vpack.c.b16 %v524, %v522
    %v557 = vpack.c.b16 %v525, %v523
    %590 = vmatpush.bf16.msra.mxu0 %v540
    %591 = vmatpush.bf16.msra.mxu0 %v538
    %592 = vmatpush.bf16.msra.mxu0 %v536
    %593 = vmatpush.bf16.msra.mxu0 %v534
    %594 = vmatpush.bf16.msra.mxu0 %v532
    %595 = vmatpush.bf16.msra.mxu0 %v530
    %596 = vmatpush.bf16.msra.mxu0 %v528
    %597 = vmatpush.bf16.msra.mxu0 %v526
    %598 = vmatmul.bf16.gmra.mxu0 %v390
    %v599 = vpop.f32.mrf.mxu0
    %v600 = vadd.f32 %v426, %v599
    %v601 = vpop.f32.mrf.mxu0
    %v602 = vadd.f32 %v426, %v601
    %603 = vdwg.mxu0
    %604 = vmatpush.bf16.msra.mxu0 %v556
    %605 = vmatpush.bf16.msra.mxu0 %v554
    %606 = vmatpush.bf16.msra.mxu0 %v552
    %607 = vmatpush.bf16.msra.mxu0 %v550
    %608 = vmatpush.bf16.msra.mxu0 %v548
    %609 = vmatpush.bf16.msra.mxu0 %v546
    %610 = vmatpush.bf16.msra.mxu0 %v544
    %611 = vmatpush.bf16.msra.mxu0 %v542
    %612 = vmatmul.bf16.gmra.mxu0 %v391
    %v613 = vpop.f32.mrf.mxu0
    %v614 = vadd.f32 %v600, %v613
    %v615 = vpop.f32.mrf.mxu0
    %v616 = vadd.f32 %v602, %v615
    %617 = vdwg.mxu0
    %618 = vmatpush.bf16.msra.mxu0 %v541
    %619 = vmatpush.bf16.msra.mxu0 %v539
    %620 = vmatpush.bf16.msra.mxu0 %v537
    %621 = vmatpush.bf16.msra.mxu0 %v535
    %622 = vmatpush.bf16.msra.mxu0 %v533
    %623 = vmatpush.bf16.msra.mxu0 %v531
    %624 = vmatpush.bf16.msra.mxu0 %v529
    %625 = vmatpush.bf16.msra.mxu0 %v527
    %626 = vmatmul.bf16.gmra.mxu0 %v390
    %v627 = vpop.f32.mrf.mxu0
    %v628 = vadd.f32 %v427, %v627
    %v629 = vpop.f32.mrf.mxu0
    %v630 = vadd.f32 %v427, %v629
    %631 = vdwg.mxu0
    %632 = vmatpush.bf16.msra.mxu0 %v557
    %633 = vmatpush.bf16.msra.mxu0 %v555
    %634 = vmatpush.bf16.msra.mxu0 %v553
    %635 = vmatpush.bf16.msra.mxu0 %v551
    %636 = vmatpush.bf16.msra.mxu0 %v549
    %637 = vmatpush.bf16.msra.mxu0 %v547
    %638 = vmatpush.bf16.msra.mxu0 %v545
    %639 = vmatpush.bf16.msra.mxu0 %v543
    %640 = vmatmul.bf16.gmra.mxu0 %v391
    %v641 = vpop.f32.mrf.mxu0
    %v642 = vadd.f32 %v628, %v641
    %v643 = vpop.f32.mrf.mxu0
    %v644 = vadd.f32 %v630, %v643
    %645 = vdwg.mxu0
    %v646 = vmax.f32 %v614, 0.0
    %v647 = vmax.f32 %v642, 0.0
    %v648 = vmax.f32 %v616, 0.0
    %v649 = vmax.f32 %v644, 0.0
    %v650 = vpack.c.bf16 %v648, %v646
    %v651 = vpack.c.bf16 %v649, %v647
    %v652 = vld [vmem:[%s8] sm:$0xf]
    %v653 = vld [vmem:[%s8 + $0x4] sm:$0xf]
    %v654 = vld [vmem:[%s8 + $0x8] sm:$0xf]
    %v655 = vld [vmem:[%s8 + $0xc] sm:$0xf]
    %v656 = vld [vmem:[%s8 + $0x10] sm:$0xf]
    %v657 = vld [vmem:[%s8 + $0x14] sm:$0xf]
    %v658 = vld [vmem:[%s8 + $0x18] sm:$0xf]
    %v659 = vld [vmem:[%s8 + $0x1c] sm:$0xf]
    %v660 = vld [vmem:[%s8 + $0x20] sm:$0xf]
    %v661 = vld [vmem:[%s8 + $0x24] sm:$0xf]
    %v662 = vld [vmem:[%s8 + $0x28] sm:$0xf]
    %v663 = vld [vmem:[%s8 + $0x2c] sm:$0xf]
    %v664 = vld [vmem:[%s8 + $0x30] sm:$0xf]
    %v665 = vld [vmem:[%s8 + $0x34] sm:$0xf]
    %v666 = vld [vmem:[%s8 + $0x38] sm:$0xf]
    %v667 = vld [vmem:[%s8 + $0x3c] sm:$0xf]
    %v668 = vld [vmem:[%s8 + $0x40] sm:$0xf]
    %v669 = vld [vmem:[%s8 + $0x44] sm:$0xf]
    %v670 = vld [vmem:[%s8 + $0x48] sm:$0xf]
    %v671 = vld [vmem:[%s8 + $0x4c] sm:$0xf]
    %v672 = vld [vmem:[%s8 + $0x50] sm:$0xf]
    %v673 = vld [vmem:[%s8 + $0x54] sm:$0xf]
    %v674 = vld [vmem:[%s8 + $0x58] sm:$0xf]
    %v675 = vld [vmem:[%s8 + $0x5c] sm:$0xf]
    %v676 = vld [vmem:[%s8 + $0x60] sm:$0xf]
    %v677 = vld [vmem:[%s8 + $0x64] sm:$0xf]
    %v678 = vld [vmem:[%s8 + $0x68] sm:$0xf]
    %v679 = vld [vmem:[%s8 + $0x6c] sm:$0xf]
    %v680 = vld [vmem:[%s8 + $0x70] sm:$0xf]
    %v681 = vld [vmem:[%s8 + $0x74] sm:$0xf]
    %v682 = vld [vmem:[%s8 + $0x78] sm:$0xf]
    %v683 = vld [vmem:[%s8 + $0x7c] sm:$0xf]
    %v684 = vld [vmem:[%s9] sm:$0x1]
    %v686 = vperm.slane %v684, 0
    %v720 = vunpack.c.l.b16 %v652
    %v721 = vunpack.c.l.b16 %v653
    %v722 = vunpack.c.l.b16 %v654
    %v723 = vunpack.c.l.b16 %v655
    %v724 = vunpack.c.l.b16 %v656
    %v725 = vunpack.c.l.b16 %v657
    %v726 = vunpack.c.l.b16 %v658
    %v727 = vunpack.c.l.b16 %v659
    %v728 = vunpack.c.l.b16 %v660
    %v729 = vunpack.c.l.b16 %v661
    %v730 = vunpack.c.l.b16 %v662
    %v731 = vunpack.c.l.b16 %v663
    %v732 = vunpack.c.l.b16 %v664
    %v733 = vunpack.c.l.b16 %v665
    %v734 = vunpack.c.l.b16 %v666
    %v735 = vunpack.c.l.b16 %v667
    %v736 = vunpack.c.l.b16 %v668
    %v737 = vunpack.c.l.b16 %v669
    %v738 = vunpack.c.l.b16 %v670
    %v739 = vunpack.c.l.b16 %v671
    %v740 = vunpack.c.l.b16 %v672
    %v741 = vunpack.c.l.b16 %v673
    %v742 = vunpack.c.l.b16 %v674
    %v743 = vunpack.c.l.b16 %v675
    %v744 = vunpack.c.l.b16 %v676
    %v745 = vunpack.c.l.b16 %v677
    %v746 = vunpack.c.l.b16 %v678
    %v747 = vunpack.c.l.b16 %v679
    %v748 = vunpack.c.l.b16 %v680
    %v749 = vunpack.c.l.b16 %v681
    %v750 = vunpack.c.l.b16 %v682
    %v751 = vunpack.c.l.b16 %v683
    %v752 = vpack.c.b16 %v721, %v720
    %v753 = vpack.c.b16 %v723, %v722
    %v754 = vpack.c.b16 %v725, %v724
    %v755 = vpack.c.b16 %v727, %v726
    %v756 = vpack.c.b16 %v729, %v728
    %v757 = vpack.c.b16 %v731, %v730
    %v758 = vpack.c.b16 %v733, %v732
    %v759 = vpack.c.b16 %v735, %v734
    %v760 = vpack.c.b16 %v737, %v736
    %v761 = vpack.c.b16 %v739, %v738
    %v762 = vpack.c.b16 %v741, %v740
    %v763 = vpack.c.b16 %v743, %v742
    %v764 = vpack.c.b16 %v745, %v744
    %v765 = vpack.c.b16 %v747, %v746
    %v766 = vpack.c.b16 %v749, %v748
    %v767 = vpack.c.b16 %v751, %v750
    %784 = vmatpush.bf16.msra.mxu0 %v759
    %785 = vmatpush.bf16.msra.mxu0 %v758
    %786 = vmatpush.bf16.msra.mxu0 %v757
    %787 = vmatpush.bf16.msra.mxu0 %v756
    %788 = vmatpush.bf16.msra.mxu0 %v755
    %789 = vmatpush.bf16.msra.mxu0 %v754
    %790 = vmatpush.bf16.msra.mxu0 %v753
    %791 = vmatpush.bf16.msra.mxu0 %v752
    %792 = vmatmul.bf16.gmra.mxu0 %v650
    %v793 = vpop.f32.mrf.mxu0
    %v794 = vadd.f32 %v686, %v793
    %v795 = vpop.f32.mrf.mxu0
    %v796 = vadd.f32 %v686, %v795
    %797 = vdwg.mxu0
    %798 = vmatpush.bf16.msra.mxu0 %v767
    %799 = vmatpush.bf16.msra.mxu0 %v766
    %800 = vmatpush.bf16.msra.mxu0 %v765
    %801 = vmatpush.bf16.msra.mxu0 %v764
    %802 = vmatpush.bf16.msra.mxu0 %v763
    %803 = vmatpush.bf16.msra.mxu0 %v762
    %804 = vmatpush.bf16.msra.mxu0 %v761
    %805 = vmatpush.bf16.msra.mxu0 %v760
    %806 = vmatmul.bf16.gmra.mxu0 %v651
    %v807 = vpop.f32.mrf.mxu0
    %v808 = vadd.f32 %v794, %v807
    %v809 = vpop.f32.mrf.mxu0
    %v810 = vadd.f32 %v796, %v809
    %811 = vdwg.mxu0
    %v812 = vmax.f32 %v808, 2e-10
    %v813 = vmax.f32 %v810, 2e-10
    %v814 = vmin.f32 %v812, 10.0
    %v815 = vmin.f32 %v813, 10.0
    %v816 = vld [vmem:[%s1] sm:$0xff]
    %v817 = vld [vmem:[%s1 + $0x8] sm:$0xff]
    %820 = vrot.lane.b32.xlu0 %v816, 8
    %v821 = vpop.permute.xlu0 %820
    %822 = vrot.lane.b32.xlu0 %v817, 8
    %v823 = vpop.permute.xlu0 %822
    %v826 = vmul.f32 %v814, %v821
    %v827 = vmul.f32 %v815, %v823
    %830 = vrot.lane.b32.xlu0 %v826, 120
    %v831 = vpop.permute.xlu0 %830
    %832 = vrot.lane.b32.xlu0 %v827, 120
    %v833 = vpop.permute.xlu0 %832
    %v836 = vadd.f32 %v808, %v831
    %v837 = vadd.f32 %v810, %v833
    %v838 = vtanh.pop %v836
    %v839 = vtanh.pop %v837
    %v840 = vmul.f32 %v838, 2.0
    %v841 = vmul.f32 %v839, 2.0
    %vm842 = vcmask 64512
    %843 = vst.msk [vmem:[#allocation7] sm:$0xff] %vm842, %v840
    %844 = vst.msk [vmem:[#allocation7 + $0x8] sm:$0xff] %vm842, %v841
    %v845 = vmul.f32 %v816, -0.5
    %v846 = vmul.f32 %v817, -0.5
    %v847 = vmul.f32 %v845, %v816
    %v848 = vmul.f32 %v846, %v817
    %v849 = vlog2.pop %v814
    %v850 = vmul.f32 %v849, 0.6931472
    %v851 = vlog2.pop %v815
    %v852 = vmul.f32 %v851, 0.6931472
    %855 = vrot.lane.b32.xlu0 %v850, 120
    %v856 = vpop.permute.xlu0 %855
    %857 = vrot.lane.b32.xlu0 %v852, 120
    %v858 = vpop.permute.xlu0 %857
    %v861 = vsub.f32 %v847, %v856
    %v862 = vsub.f32 %v848, %v858
    %v863 = vmul.f32 %v836, 2.0
    %v864 = vmul.f32 %v837, 2.0
    %v865 = vadd.f32 %v861, %v863
    %v866 = vadd.f32 %v862, %v864
    %v867 = vmul.f32 %v836, -2.0
    %v868 = vmul.f32 %v837, -2.0
    %v869 = vmax.f32 %v867, 0.0
    %v870 = vmax.f32 %v868, 0.0
    %v871 = vand.u32 2147483647, %v867
    %v872 = vand.u32 2147483647, %v868
    %v873 = vsub.f32 0.0, %v871
    %v874 = vsub.f32 0.0, %v872
    %v875 = vmul.f32 %v873, 1.442695
    %v876 = vpow.pop %v875
    %v877 = vmul.f32 %v874, 1.442695
    %v878 = vpow.pop %v877
    %v879 = vadd.f32 %v876, 1.0
    %v880 = vlog2.pop %v879
    %v881 = vmul.f32 %v880, 0.6931472
    %v882 = vmul.f32 -0.5, %v876
    %v883 = vadd.f32 %v882, 1.0
    %v884 = vmul.f32 %v883, %v876
    %v885 = vand.u32 2147483647, %v876
    %vm886 = vcmp.lt.f32.partialorder %v885, 0.0004427343
    %v887 = vsel %vm886, %v884, %v881
    %v888 = vadd.f32 %v878, 1.0
    %v889 = vlog2.pop %v888
    %v890 = vmul.f32 %v889, 0.6931472
    %v891 = vmul.f32 -0.5, %v878
    %v892 = vadd.f32 %v891, 1.0
    %v893 = vmul.f32 %v892, %v878
    %v894 = vand.u32 2147483647, %v878
    %vm895 = vcmp.lt.f32.partialorder %v894, 0.0004427343
    %v896 = vsel %vm895, %v893, %v890
    %v897 = vadd.f32 %v869, %v887
    %v898 = vadd.f32 %v870, %v896
    %v899 = vmul.f32 %v897, 2.0
    %v900 = vmul.f32 %v898, 2.0
    %v901 = vadd.f32 %v865, %v899
    %v902 = vadd.f32 %v866, %v900
    %v903 = vsel %vm842, %v901, 0.0
    %904 = vadd.xlane.f32.xlu0 %v903
    %v905 = vpop.xlane.xlu0 %904
    %v906 = vsel %vm842, %v902, 0.0
    %907 = vadd.xlane.f32.xlu0 %v906
    %v908 = vpop.xlane.xlu0 %907
    %v909 = vadd.f32 %v905, -18.441864
    %v910 = vadd.f32 %v908, -18.441864
    %vm911 = vcmask 72768
    %912 = vst.msk [vmem:[#allocation7] sm:$0xff] %vm911, %v909
    %913 = vst.msk [vmem:[#allocation7 + $0x8] sm:$0xff] %vm911, %v910
    // Predicated region
    $region50: #{tpu_custom_call.1} parent=1 // pred_check
      _
    $region51: #{tpu_custom_call.1} parent=1 // pred_check_branch
      %915 = sbr.rel (0) target = $region53
    $region52: #{tpu_custom_call.1} parent=1 // pred_region
      %917 = vsyncadd [#allocation4], 0
      %s918 = sshll.u32 [#allocation7], 4
      %s919 = int_to_ptr.vmem [resolvable:$true] %s918
      %s920 = sshll.u32 %s10, 4
      %s921 = int_to_ptr.hbm [resolvable:$true] %s920
      %926 = dma.vmem_to_hbm [thread:$0]  %s919, 256, %s921, [#allocation4], 128, 128, 8
    $region53: #{tpu_custom_call.1} parent=1 // pred_fallthru
      _
    // Predicated region
    $region54: #{tpu_custom_call.1} parent=1 // pred_check
      _
    $region55: #{tpu_custom_call.1} parent=1 // pred_check_branch
      %928 = sbr.rel (0) target = $region57
    $region56: #{tpu_custom_call.1} parent=1 // pred_region
      %930 = dma.done [#allocation4], 256
    $region57: #{tpu_custom_call.1} parent=1 // pred_fallthru
      _
    %931 = vsyncpa [#allocation3], 1
    %932 = vsyncpa [#allocation6], 1
    %933 = vsyncpa [#allocation4], 1

</llo_original>
